<compile_context>
chip_gen: v6e
topology: v6e:2x2x1
jax: 0.10.0
libtpu: 0.0.40
codegen_flags: <defaults>
</compile_context>

<pallas_src>
import functools

import jax
import jax.numpy as jnp
from jax.experimental import pallas as pl
from jax.experimental.pallas import tpu as pltpu


def _round_up(x: int, m: int) -> int:
    return ((x + m - 1) // m) * m


def _pick_tile(dim: int, cap: int, align: int):
    """Pick (tile, padded_dim). Avoids padding whenever `dim` is already aligned."""
    cap = max(align, (cap // align) * align)
    if dim % align == 0:
        # Largest multiple of `align` that is <= cap and divides dim -> no padding.
        t = min(cap, dim)
        while dim % t != 0:
            t -= align
        return t, dim
    # Unaligned dim: pad up to a multiple of the tile.
    t = min(cap, _round_up(dim, align))
    return t, _round_up(dim, t)


def _bounded_nn_last_kernel(x_ref, w_ref, b_ref, o_ref, *, mxu_dtype):
    k = pl.program_id(2)

    @pl.when(k == 0)
    def _():
        # Fold the bias into the accumulator init (no separate finalize pass).
        o_ref[...] = jnp.broadcast_to(b_ref[...], o_ref.shape).astype(o_ref.dtype)

    # bounding_op(W) = W**2: square in f32 on the VPU (co-issues with MXU
    # pushes), THEN cast to the MXU operand dtype -> single rounding of W**2.
    w = w_ref[...]
    w2 = (w * w).astype(mxu_dtype)
    x = x_ref[...].astype(mxu_dtype)
    # Output tile is f32 and resident across the K axis -> accumulate directly.
    o_ref[...] += jnp.dot(x, w2, preferred_element_type=jnp.float32)


def bounded_nn_layer_last(x, w, bias, *, tm_max=512, tn_max=1024, tk_max=2048,
                          mxu_dtype=jnp.bfloat16):
    """x: (B, d_in), w: (d_in, d_out), bias: (d_out,) -> (B, d_out) f32."""
    B, d_in = x.shape
    d_in_w, d_out = w.shape
    assert d_in == d_in_w
    assert bias.shape == (d_out,)

    # Tile sizes: M aligned to 8 sublanes (f32), N/K lane-dense (multiples of 128).
    tm, m_pad = _pick_tile(B, tm_max, 8)
    tn, n_pad = _pick_tile(d_out, tn_max, 128)
    tk, k_pad = _pick_tile(d_in, tk_max, 128)

    # Megacore guard: if both "parallel" axes have a single block, split N (or M)
    # so v7x's two TensorCores both get work (harmless no-op on 1-TC chips).
    if m_pad // tm == 1 and n_pad // tn == 1:
        if n_pad >= 2 * 128:
            for blocks in range(2, n_pad // 128 + 1):
                t = n_pad // blocks
                if n_pad % blocks == 0 and t % 128 == 0:
                    tn = t
                    break
        elif m_pad >= 2 * 8:
            for blocks in range(2, m_pad // 8 + 1):
                t = m_pad // blocks
                if m_pad % blocks == 0 and t % 8 == 0:
                    tm = t
                    break

    # Zero padding only when needed (skips the extra HBM pass for aligned shapes).
    # Zero padding is semantics-preserving: padded W rows square to 0 and padded
    # X columns are 0, so they contribute nothing; padded out rows/cols are sliced.
    x_p = x if (m_pad, k_pad) == (B, d_in) else jnp.pad(
        x, ((0, m_pad - B), (0, k_pad - d_in)))
    w_p = w if (k_pad, n_pad) == (d_in, d_out) else jnp.pad(
        w, ((0, k_pad - d_in), (0, n_pad - d_out)))
    b_p = bias if n_pad == d_out else jnp.pad(bias, (0, n_pad - d_out))
    b_p = b_p.reshape(1, n_pad)

    grid = (m_pad // tm, n_pad // tn, k_pad // tk)

    # VMEM budget: double-buffered tiles + headroom, capped to stay safe on
    # v7x's 64 MiB/TC VMEM.  (v5e/v6e: pass larger tm_max/tn_max if desired.)
    tile_bytes = 4 * (tm * tk + tk * tn + tm * tn + 8 * tn)
    vmem_limit = int(min(56 << 20, max(32 << 20, 2 * tile_bytes + (12 << 20))))

    flops = 2 * m_pad * k_pad * n_pad + k_pad * n_pad * grid[0]  # matmul + W**2
    bytes_accessed = 4 * (
        m_pad * k_pad * grid[1]      # X streamed once per N tile
        + k_pad * n_pad * grid[0]    # W streamed once per M tile
        + n_pad                      # bias
        + m_pad * n_pad              # output
    )

    out_p = pl.pallas_call(
        functools.partial(_bounded_nn_last_kernel, mxu_dtype=mxu_dtype),
        out_shape=jax.ShapeDtypeStruct((m_pad, n_pad), jnp.float32),
        grid=grid,
        in_specs=[
            pl.BlockSpec((tm, tk), lambda i, j, k: (i, k)),
            pl.BlockSpec((tk, tn), lambda i, j, k: (k, j)),
            pl.BlockSpec((1, tn), lambda i, j, k: (0, j)),
        ],
        out_specs=pl.BlockSpec((tm, tn), lambda i, j, k: (i, j)),
        compiler_params=pltpu.CompilerParams(
            dimension_semantics=("parallel", "parallel", "arbitrary"),
            vmem_limit_bytes=vmem_limit,
        ),
        cost_estimate=pl.CostEstimate(
            flops=flops, transcendentals=0, bytes_accessed=bytes_accessed),
    )(x_p, w_p, b_p)

    if (m_pad, n_pad) != (B, d_out):
        out_p = out_p[:B, :d_out]
    return out_p


def _reference(x, w, bias, mxu_dtype=None):
    """High-precision reference; optionally applies the same operand rounding."""
    xq, w2 = x, w * w
    if mxu_dtype is not None and jnp.dtype(mxu_dtype) != jnp.dtype(jnp.float32):
        xq = xq.astype(mxu_dtype).astype(jnp.float32)
        w2 = w2.astype(mxu_dtype).astype(jnp.float32)
    return jnp.dot(xq, w2, precision=jax.lax.Precision.HIGHEST) + bias


if __name__ == "__main__":
    key = jax.random.PRNGKey(0)
    k1, k2 = jax.random.split(key)

    def make(k, B, d_in, d_out):
        kx, kw, kb = jax.random.split(k, 3)
        return (jax.random.normal(kx, (B, d_in), dtype=jnp.float32),
                jax.random.normal(kw, (d_in, d_out), dtype=jnp.float32),
                jax.random.normal(kb, (d_out,), dtype=jnp.float32))

    # 1) Small, module-sized problem on the default bf16 MXU-operand path,
    #    checked against a reference with identical operand rounding.
    x, w, b = make(k1, 8, 32, 64)
    out = jax.block_until_ready(bounded_nn_layer_last(x, w, b))
    ref = _reference(x, w, b, jnp.bfloat16)
    assert out.shape == (8, 64)
    assert jnp.allclose(out, ref, atol=2e-3, rtol=2e-3), (
        float(jnp.max(jnp.abs(out - ref))))

    # 2) Exact f32 MXU path against the exact f32 reference.
    out32 = jax.block_until_ready(
        bounded_nn_layer_last(x, w, b, mxu_dtype=jnp.float32))
    ref32 = _reference(x, w, b)
    assert jnp.allclose(out32, ref32, atol=1e-4, rtol=1e-4), (
        float(jnp.max(jnp.abs(out32 - ref32))))

    # 3) Non-aligned shapes with small tile caps: exercises the (M, N, K) grid,
    #    the k==0 bias init / direct output accumulation, zero padding, and the
    #    megacore split guard.
    x, w, b = make(k2, 130, 260, 300)
    out = jax.block_until_ready(
        bounded_nn_layer_last(x, w, b, tm_max=64, tn_max=128, tk_max=128))
    ref = _reference(x, w, b, jnp.bfloat16)
    assert out.shape == (130, 300)
    assert jnp.allclose(out, ref, atol=2e-3, rtol=2e-3), (
        float(jnp.max(jnp.abs(out - ref))))

    print("KERNEL_OK")
</pallas_src>

<mosaic_0001>
module attributes {stable_mosaic.version = 11 : i64} {
  func.func @_bounded_nn_last_kernel(%arg0: i32, %arg1: i32, %arg2: i32, %arg3: memref<8x128xf32, #tpu.memory_space<vmem>>, %arg4: memref<128x128xf32, #tpu.memory_space<vmem>>, %arg5: memref<1x128xf32, #tpu.memory_space<vmem>>, %arg6: memref<8x128xf32, #tpu.memory_space<vmem>>) attributes {dimension_semantics = [#tpu.dimension_semantics<parallel>, #tpu.dimension_semantics<parallel>, #tpu.dimension_semantics<arbitrary>], iteration_bounds = array<i64: 1, 1, 1>, scalar_prefetch = 0 : i64, scratch_operands = 0 : i64, tpu.core_type = #tpu.core_type<tc>, window_params = [{transform_indices = @transform_0, window_bounds = array<i64: 8, 128>}, {transform_indices = @transform_1, window_bounds = array<i64: 128, 128>}, {transform_indices = @transform_2, window_bounds = array<i64: 1, 128>}, {transform_indices = @transform_3, window_bounds = array<i64: 8, 128>}]} {
    %c0_i32 = arith.constant 0 : i32
    %0 = arith.cmpi eq, %arg2, %c0_i32 : i32
    %1 = arith.extui %0 : i1 to i32
    %c0_i32_0 = arith.constant 0 : i32
    %2 = arith.cmpi ne, %1, %c0_i32_0 : i32
    scf.if %2 {
      %c0_8 = arith.constant 0 : index
      %c0_9 = arith.constant 0 : index
      %12 = vector.load %arg5[%c0_8, %c0_9] : memref<1x128xf32, #tpu.memory_space<vmem>>, vector<1x128xf32>
      %13 = vector.shape_cast %12 : vector<1x128xf32> to vector<1x128xf32>
      %14 = vector.broadcast %13 : vector<1x128xf32> to vector<8x128xf32>
      %c0_10 = arith.constant 0 : index
      %c0_11 = arith.constant 0 : index
      %15 = vector.load %arg6[%c0_10, %c0_11] : memref<8x128xf32, #tpu.memory_space<vmem>>, vector<8x128xf32>
      tpu.vector_store %arg6[%c0_10, %c0_11], %14 {strides = array<i32>} : memref<8x128xf32, #tpu.memory_space<vmem>>, vector<8x128xf32>,
    } else {
    }
    %c0 = arith.constant 0 : index
    %c0_1 = arith.constant 0 : index
    %3 = vector.load %arg4[%c0, %c0_1] : memref<128x128xf32, #tpu.memory_space<vmem>>, vector<128x128xf32>
    %4 = arith.mulf %3, %3 : vector<128x128xf32>
    %5 = arith.truncf %4 : vector<128x128xf32> to vector<128x128xbf16>
    %c0_2 = arith.constant 0 : index
    %c0_3 = arith.constant 0 : index
    %6 = vector.load %arg3[%c0_2, %c0_3] : memref<8x128xf32, #tpu.memory_space<vmem>>, vector<8x128xf32>
    %7 = arith.truncf %6 : vector<8x128xf32> to vector<8x128xbf16>
    %c0_4 = arith.constant 0 : index
    %c0_5 = arith.constant 0 : index
    %8 = vector.load %arg6[%c0_4, %c0_5] : memref<8x128xf32, #tpu.memory_space<vmem>>, vector<8x128xf32>
    %cst = arith.constant dense<0.000000e+00> : vector<8x128xf32>
    %9 = tpu.matmul %7, %5, %cst {dimension_numbers = #tpu.dot_dimension_numbers<[1], [0], [0], [1], [0, 0, 1, 1], [], []>} : vector<8x128xbf16>, vector<128x128xbf16>, vector<8x128xf32> -> vector<8x128xf32>
    %10 = arith.addf %8, %9 : vector<8x128xf32>
    %c0_6 = arith.constant 0 : index
    %c0_7 = arith.constant 0 : index
    %11 = vector.load %arg6[%c0_6, %c0_7] : memref<8x128xf32, #tpu.memory_space<vmem>>, vector<8x128xf32>
    tpu.vector_store %arg6[%c0_6, %c0_7], %10 {strides = array<i32>} : memref<8x128xf32, #tpu.memory_space<vmem>>, vector<8x128xf32>,
    return
  }
  func.func @transform_0(%arg0: i32, %arg1: i32, %arg2: i32) -> (i32, i32) {
    %c0_i32 = arith.constant 0 : i32
    return %arg0, %arg2 : i32, i32
  }
  func.func @transform_1(%arg0: i32, %arg1: i32, %arg2: i32) -> (i32, i32) {
    %c0_i32 = arith.constant 0 : i32
    return %arg2, %arg1 : i32, i32
  }
  func.func @transform_2(%arg0: i32, %arg1: i32, %arg2: i32) -> (i32, i32) {
    %c0_i32 = arith.constant 0 : i32
    %c0_i32_0 = arith.constant 0 : i32
    return %c0_i32, %arg1 : i32, i32
  }
  func.func @transform_3(%arg0: i32, %arg1: i32, %arg2: i32) -> (i32, i32) {
    %c0_i32 = arith.constant 0 : i32
    return %arg0, %arg1 : i32, i32
  }
}

</mosaic_0001>

<llo_original>
// kernel: tpu_custom_call.1
$region0: #{tpu_custom_call.1}
  #allocation0 [shape = 'u32[]', space=smem, size = 0x4, offset = 0x4, fixed_abs, tag = 'smem constant byte address 0x4 - core index']
  #allocation1 [shape = 'u32[144,128]{1,0:T(1,128)}', space=vmem, size = 0x12000, scoped, tag = 'internal scratch']
  %s0 = inlined_call_operand.hbm [shape: f32[8,128], index: 0, kind: input, shape index: {}]
  %s1 = inlined_call_operand.hbm [shape: f32[128,128], index: 1, kind: input, shape index: {}]
  %s2 = inlined_call_operand.vmem [shape: f32[1,128], index: 2, kind: input, shape index: {}]
  %s3 = inlined_call_operand.hbm [shape: f32[8,128], index: 3, kind: output, shape index: {}]
  %s4 = sld [smem:[#allocation0]]
  $region34: #{tpu_custom_call.1} parent=0
    _
  %s6 = ssub.s32 1, %s4
  %s7 = scalar_select 0, %s6, %s4
  $region1: #{tpu_custom_call.1} parent=0
    #allocation2 [shape = 'u8[4096]{0}', space=vmem, size = 0x1000, scoped, tag = 'input window, operand 0, single buffered']
    #allocation3 [shape = 's32[1]{0}', space=sflag, size = 0x4, scoped, tag = 'scoped memory for tpu_custom_call.1']
    #allocation4 [shape = 's32[1]{0}', space=sflag, size = 0x4, scoped, tag = 'scoped memory for tpu_custom_call.1']
    #allocation5 [shape = 'u8[65536]{0}', space=vmem, size = 0x10000, scoped, tag = 'input window, operand 1, single buffered']
    #allocation6 [shape = 's32[1]{0}', space=sflag, size = 0x4, scoped, tag = 'scoped memory for tpu_custom_call.1']
    #allocation7 [shape = 'u8[4096]{0}', space=vmem, size = 0x1000, scoped, tag = 'output window, operand 0, single buffered']
    %8 = vsyncpa [#allocation3], 0
    %9 = vsyncpa [#allocation6], 0
    %10 = vsyncpa [#allocation4], 0
    // Predicated region
    $region2: #{tpu_custom_call.1} parent=1 // pred_check
      _
    $region3: #{tpu_custom_call.1} parent=1 // pred_check_branch
      %12 = sbr.rel (0) target = $region5
    $region4: #{tpu_custom_call.1} parent=1 // pred_region
      %s14 = ssub.s32 128, 128
      %15 = vsyncadd [#allocation3], %s14
      %s17 = sshll.u32 [#allocation2], 4
      %s18 = int_to_ptr.vmem [resolvable:$true] %s17
      %20 = dma.hbm_to_vmem [thread:$0]  %s0, 128, %s18, [#allocation3]
    $region5: #{tpu_custom_call.1} parent=1 // pred_fallthru
      _
    // Predicated region
    $region6: #{tpu_custom_call.1} parent=1 // pred_check
      _
    $region7: #{tpu_custom_call.1} parent=1 // pred_check_branch
      %22 = sbr.rel (0) target = $region9
    $region8: #{tpu_custom_call.1} parent=1 // pred_region
      %s24 = ssub.s32 2048, 2048
      %25 = vsyncadd [#allocation6], %s24
      %s26 = sshll.u32 [#allocation5], 4
      %s27 = int_to_ptr.vmem [resolvable:$true] %s26
      %32 = dma.hbm_to_vmem [thread:$0]  %s1, 2048, %s27, [#allocation6], 128, 128, 8
    $region9: #{tpu_custom_call.1} parent=1 // pred_fallthru
      _
    // Predicated region
    $region10: #{tpu_custom_call.1} parent=1 // pred_check
      _
    $region11: #{tpu_custom_call.1} parent=1 // pred_check_branch
      %34 = sbr.rel (0) target = $region13
    $region12: #{tpu_custom_call.1} parent=1 // pred_region
      _
    $region13: #{tpu_custom_call.1} parent=1 // pred_fallthru
      _
    // Predicated region
    $region14: #{tpu_custom_call.1} parent=1 // pred_check
      _
    $region15: #{tpu_custom_call.1} parent=1 // pred_check_branch
      %36 = sbr.rel (0) target = $region17
    $region16: #{tpu_custom_call.1} parent=1 // pred_region
      %37 = dma.done [#allocation3], 128
    $region17: #{tpu_custom_call.1} parent=1 // pred_fallthru
      _
    // Predicated region
    $region18: #{tpu_custom_call.1} parent=1 // pred_check
      _
    $region19: #{tpu_custom_call.1} parent=1 // pred_check_branch
      %39 = sbr.rel (0) target = $region21
    $region20: #{tpu_custom_call.1} parent=1 // pred_region
      %40 = dma.done [#allocation6], 2048
    $region21: #{tpu_custom_call.1} parent=1 // pred_fallthru
      _
    %p42 = scmp.eq.s32.totalorder 0, 0
    // Predicated region
    $region22: #{tpu_custom_call.1} parent=1 // pred_check
      %p43 = pneg %p42
    $region23: #{tpu_custom_call.1} parent=1 // pred_check_branch
      %45 = sbr.rel (%p43) target = $region25
    $region24: #{tpu_custom_call.1} parent=1 // pred_region
      %v46 = vld [vmem:[%s2] sm:$0x1]
      %v48 = vlaneseq
      %v49 = vshrl.u32 %v48, 7
      %v50 = vsub.s32 0, %v49
      %v51 = vrot.slane %v46, %v50
      %53 = vst [vmem:[#allocation7] sm:$0xff] %v51
    $region25: #{tpu_custom_call.1} parent=1 // pred_fallthru
      _
    %v54 = vld [vmem:[#allocation5] sm:$0xff]
    %v55 = vld [vmem:[#allocation5 + $0x8] sm:$0xff]
    %v56 = vld [vmem:[#allocation5 + $0x10] sm:$0xff]
    %v57 = vld [vmem:[#allocation5 + $0x18] sm:$0xff]
    %v58 = vld [vmem:[#allocation5 + $0x20] sm:$0xff]
    %v59 = vld [vmem:[#allocation5 + $0x28] sm:$0xff]
    %v60 = vld [vmem:[#allocation5 + $0x30] sm:$0xff]
    %v61 = vld [vmem:[#allocation5 + $0x38] sm:$0xff]
    %v62 = vld [vmem:[#allocation5 + $0x40] sm:$0xff]
    %v63 = vld [vmem:[#allocation5 + $0x48] sm:$0xff]
    %v64 = vld [vmem:[#allocation5 + $0x50] sm:$0xff]
    %v65 = vld [vmem:[#allocation5 + $0x58] sm:$0xff]
    %v66 = vld [vmem:[#allocation5 + $0x60] sm:$0xff]
    %v67 = vld [vmem:[#allocation5 + $0x68] sm:$0xff]
    %v68 = vld [vmem:[#allocation5 + $0x70] sm:$0xff]
    %v69 = vld [vmem:[#allocation5 + $0x78] sm:$0xff]
    %v70 = vmul.f32 %v54, %v54
    %v71 = vmul.f32 %v55, %v55
    %v72 = vmul.f32 %v56, %v56
    %v73 = vmul.f32 %v57, %v57
    %v74 = vmul.f32 %v58, %v58
    %v75 = vmul.f32 %v59, %v59
    %v76 = vmul.f32 %v60, %v60
    %v77 = vmul.f32 %v61, %v61
    %v78 = vmul.f32 %v62, %v62
    %v79 = vmul.f32 %v63, %v63
    %v80 = vmul.f32 %v64, %v64
    %v81 = vmul.f32 %v65, %v65
    %v82 = vmul.f32 %v66, %v66
    %v83 = vmul.f32 %v67, %v67
    %v84 = vmul.f32 %v68, %v68
    %v85 = vmul.f32 %v69, %v69
    %v86 = vpack.c.bf16 %v71, %v70
    %v87 = vpack.c.bf16 %v73, %v72
    %v88 = vpack.c.bf16 %v75, %v74
    %v89 = vpack.c.bf16 %v77, %v76
    %v90 = vpack.c.bf16 %v79, %v78
    %v91 = vpack.c.bf16 %v81, %v80
    %v92 = vpack.c.bf16 %v83, %v82
    %v93 = vpack.c.bf16 %v85, %v84
    %v94 = vld [vmem:[#allocation2] sm:$0xff]
    %v95 = vpack.c.bf16 %v94, %v94
    %v96 = vld [vmem:[#allocation7] sm:$0xff]
    %97 = vmatprep.subr.bf16.mxu0 0
    %98 = vmatpush1.bf16.msra.mxu0 %v93
    %99 = vmatprep.subr.bf16.mxu0 0
    %100 = vmatpush1.bf16.msra.mxu0 %v92
    %101 = vmatprep.subr.bf16.mxu0 0
    %102 = vmatpush1.bf16.msra.mxu0 %v91
    %103 = vmatprep.subr.bf16.mxu0 0
    %104 = vmatpush1.bf16.msra.mxu0 %v90
    %105 = vmatprep.subr.bf16.mxu0 0
    %106 = vmatpush1.bf16.msra.mxu0 %v89
    %107 = vmatprep.subr.bf16.mxu0 0
    %108 = vmatpush1.bf16.msra.mxu0 %v88
    %109 = vmatprep.subr.bf16.mxu0 0
    %110 = vmatpush1.bf16.msra.mxu0 %v87
    %111 = vmatprep.subr.bf16.mxu0 0
    %112 = vmatpush1.bf16.msra.mxu0 %v86
    %113 = vmatprep.subr.bf16.mxu0 0
    %114 = vmatpush2.bf16.msra.mxu0 0
    %115 = vmatprep.subr.bf16.mxu0 0
    %116 = vmatpush2.bf16.msra.mxu0 0
    %117 = vmatprep.subr.bf16.mxu0 0
    %118 = vmatpush2.bf16.msra.mxu0 0
    %119 = vmatprep.subr.bf16.mxu0 0
    %120 = vmatpush2.bf16.msra.mxu0 0
    %121 = vmatprep.subr.bf16.mxu0 0
    %122 = vmatpush2.bf16.msra.mxu0 0
    %123 = vmatprep.subr.bf16.mxu0 0
    %124 = vmatpush2.bf16.msra.mxu0 0
    %125 = vmatprep.subr.bf16.mxu0 0
    %126 = vmatpush2.bf16.msra.mxu0 0
    %127 = vmatprep.subr.bf16.mxu0 0
    %128 = vmatpush2.bf16.msra.mxu0 0
    %129 = vmatprep.mubr.bf16.mxu0 0
    %130 = vmatmul.mubr.bf16.gmra.mxu0 %v95
    %v131 = vpop.f32.mrf.mxu0
    %v132 = vadd.f32 0.0, %v131
    %v133 = vpop.f32.mrf.mxu0
    %v134 = vpop.f32.mrf.mxu0
    %v135 = vpop.f32.mrf.mxu0
    %136 = vdwg.mxu0
    %v137 = vadd.f32 %v96, %v132
    %138 = vst [vmem:[#allocation7] sm:$0xff] %v137
    // Predicated region
    $region26: #{tpu_custom_call.1} parent=1 // pred_check
      _
    $region27: #{tpu_custom_call.1} parent=1 // pred_check_branch
      %140 = sbr.rel (0) target = $region29
    $region28: #{tpu_custom_call.1} parent=1 // pred_region
      %s142 = ssub.s32 128, 128
      %143 = vsyncadd [#allocation4], %s142
      %s145 = sshll.u32 [#allocation7], 4
      %s146 = int_to_ptr.vmem [resolvable:$true] %s145
      %148 = dma.vmem_to_hbm [thread:$0]  %s146, 128, %s3, [#allocation4]
    $region29: #{tpu_custom_call.1} parent=1 // pred_fallthru
      _
    // Predicated region
    $region30: #{tpu_custom_call.1} parent=1 // pred_check
      _
    $region31: #{tpu_custom_call.1} parent=1 // pred_check_branch
      %150 = sbr.rel (0) target = $region33
    $region32: #{tpu_custom_call.1} parent=1 // pred_region
      %151 = dma.done [#allocation4], 128
    $region33: #{tpu_custom_call.1} parent=1 // pred_fallthru
      _
    %152 = vsyncpa [#allocation3], 1
    %153 = vsyncpa [#allocation6], 1
    %154 = vsyncpa [#allocation4], 1

</llo_original>
